<compile_context>
chip_gen: v5e
topology: v5e:2x2
jax: 0.10.0
libtpu: 0.0.40
codegen_flags: <defaults>
</compile_context>

<pallas_src>
import math

import numpy as np
import jax
import jax.numpy as jnp
from jax import lax
from jax.experimental import pallas as pl
from jax.experimental.pallas import tpu as pltpu


# ----------------------------------------------------------------------------
# DCT filter construction (mirrors FDLayer.get_dct_filter)
# ----------------------------------------------------------------------------
def get_dct_basis(num_basis):
    all_basis_x = [i for i in range(8) for _ in range(8)]
    all_basis_y = [j for _ in range(8) for j in range(8)]
    return all_basis_x[:num_basis], all_basis_y[:num_basis]


def _build_filter(pos, freq, POS):
    result = math.cos(math.pi * freq * (pos + 0.5) / POS) / math.sqrt(POS)
    return result if freq == 0 else result * math.sqrt(2)


def get_dct_basis_filter(tile_x, tile_y, mapper_x, mapper_y):
    """Compact filter: one (tile_x, tile_y) plane per DCT basis."""
    f = np.zeros((len(mapper_x), tile_x, tile_y), np.float32)
    for i, (u_x, v_y) in enumerate(zip(mapper_x, mapper_y)):
        for t_x in range(tile_x):
            for t_y in range(tile_y):
                f[i, t_x, t_y] = (_build_filter(t_x, u_x, tile_x)
                                  * _build_filter(t_y, v_y, tile_y))
    return f


def get_dct_filter(tile_x, tile_y, mapper_x, mapper_y, channel):
    """Full per-channel filter, exactly as FDLayer.get_dct_filter (reference)."""
    basis = get_dct_basis_filter(tile_x, tile_y, mapper_x, mapper_y)
    c_part = channel // len(mapper_x)
    full = np.zeros((channel, tile_x, tile_y), np.float32)
    full[: len(mapper_x) * c_part] = np.repeat(basis, c_part, axis=0)
    return full


# ----------------------------------------------------------------------------
# Kernels
# ----------------------------------------------------------------------------
def _fused_kernel(x_ref, filt_ref, w1t_ref, w2_ref, y_ref):
    """One sample resident in VMEM: DCT reduction + gate MLP + rescale."""
    x = x_ref[0]                                                    # (C, HW)
    # DCT-weighted spatial reduction on the VPU, full f32.
    out_c = jnp.sum(x.astype(jnp.float32) * filt_ref[...],
                    axis=1, keepdims=True)                          # (C, 1)
    # Tiny 2-layer MLP gate (channels stay on sublanes -> (C, 1) orientation).
    h1 = jnp.maximum(jnp.sum(w1t_ref[...] * out_c, axis=0, keepdims=True), 0.0)
    logits = jnp.sum(w2_ref[...] * h1, axis=1, keepdims=True)       # (C, 1)
    s = jax.nn.sigmoid(logits)
    # Rescale the same resident tile (input dtype, lane-dense full-hw store).
    y_ref[...] = (x * s.astype(x.dtype))[None]


def _reduce_kernel(x_ref, filt_ref, out_ref):
    """Pass 1 (two-pass path): per-channel-block DCT-weighted reduction."""
    out_ref[...] = jnp.sum(x_ref[0].astype(jnp.float32) * filt_ref[...],
                           axis=1, keepdims=True)[None]             # (1, tc, 1)


def _rescale_kernel(x_ref, s_ref, y_ref):
    """Pass 2 (two-pass path): channel-wise rescale in the input dtype."""
    y_ref[...] = x_ref[...] * s_ref[...].astype(x_ref.dtype)


# ----------------------------------------------------------------------------
# VMEM budgeting
# ----------------------------------------------------------------------------
def _vmem_limit_bytes():
    """Generation-aware scoped-VMEM limit (v5e/v6e: 128 MiB, v7x: 64 MiB)."""
    cap = 64 * 1024 * 1024
    try:
        info = pltpu.get_tpu_info()
        cap = getattr(info, "vmem_capacity_bytes", cap) or cap
    except Exception:
        pass
    return max(32 * 1024 * 1024, min(int(cap * 0.5), 96 * 1024 * 1024))


def _fused_footprint_bytes(c, hw, cr, itemsize):
    f32 = 4
    tile_in = c * hw * itemsize
    tile_f32 = c * hw * f32
    return (2 * tile_in            # x double-buffered
            + 2 * tile_in          # y double-buffered
            + 2 * tile_f32         # resident filter (counted x2 to be safe)
            + 4 * c * cr * f32     # gate weights (x2 buffers each)
            + 2 * tile_f32         # headroom for in-kernel f32 temporaries
            + (1 << 20))           # misc slack


def _choose_channel_tile(c, hw, itemsize, budget):
    """Largest channel tile (multiple of 8 dividing C, or C itself) that fits."""
    cands = [d for d in range(8, c, 8) if c % d == 0]
    cands.append(c)

    def fp(tc):
        t_in = tc * hw * itemsize
        t_f32 = tc * hw * 4
        p1 = 2 * t_in + 2 * t_f32 + t_f32   # pass 1: x(2) + filter(2) + temps
        p2 = 4 * t_in                       # pass 2: x(2) + y(2)
        return max(p1, p2) + (1 << 20)

    fits = [tc for tc in cands if fp(tc) <= budget]
    # TODO(synk): if even the smallest channel tile does not fit (enormous HW),
    # the HW axis would additionally need lane tiling with a masked tail.
    return max(fits) if fits else min(cands)


# ----------------------------------------------------------------------------
# Wrapper
# ----------------------------------------------------------------------------
def fdm_forward(x, dct_basis_filter, w1, w2, dct_h, dct_w, *,
                single_pass=None, channel_tile=None):
    """
    x:                (N, C, H, W)
    dct_basis_filter: (num_basis, dct_h, dct_w) compact DCT filter; the
                      module's per-channel weight is this repeated
                      C // num_basis times along channels.
    w1: (C//r, C)  nn.Linear(C, C//r, bias=False).weight (PyTorch layout)
    w2: (C, C//r)  nn.Linear(C//r, C, bias=False).weight (PyTorch layout)
    """
    n, c, h, w = x.shape
    nb = dct_basis_filter.shape[0]
    assert c % nb == 0, "channel must be divisible by num_basis"
    c_part = c // nb
    cr = w1.shape[0]

    # Fuse adaptive_avg_pool2d (divisible case) into the per-channel filter:
    # pooling + DCT-weighted sum == full-resolution weighted sum with the
    # filter replicated over each pooling window and divided by its area.
    # TODO(synk): non-divisible adaptive_avg_pool2d (uneven windows) not implemented.
    assert h % dct_h == 0 and w % dct_w == 0
    kh, kw = h // dct_h, w // dct_w
    eff = jnp.asarray(dct_basis_filter, jnp.float32)
    if kh > 1 or kw > 1:
        eff = jnp.repeat(jnp.repeat(eff, kh, axis=1), kw, axis=2) / float(kh * kw)
    hw = h * w
    filt_full = jnp.repeat(eff, c_part, axis=0).reshape(c, hw)      # (C, HW) f32

    w1f = jnp.asarray(w1, jnp.float32)                              # (Cr, C)
    w2f = jnp.asarray(w2, jnp.float32)                              # (C, Cr)

    itemsize = jnp.dtype(x.dtype).itemsize
    vmem_limit = _vmem_limit_bytes()
    budget = int(0.85 * vmem_limit)

    xf = x.reshape(n, c, hw)          # contiguous-dim reshape: no copy, no pad

    fits = _fused_footprint_bytes(c, hw, cr, itemsize) <= budget
    if single_pass is None:
        # The fused path minimizes HBM traffic (2x the tensor) but only the
        # batch axis is parallel; for N == 1 prefer the channel-parallel
        # two-pass path so both v7x TensorCores get work.
        single_pass = fits and n > 1
    single_pass = single_pass and fits

    if single_pass:
        y = pl.pallas_call(
            _fused_kernel,
            out_shape=jax.ShapeDtypeStruct((n, c, hw), x.dtype),
            grid=(n,),
            in_specs=[
                pl.BlockSpec((1, c, hw), lambda i: (i, 0, 0)),
                pl.BlockSpec((c, hw), lambda i: (0, 0)),       # resident filter
                pl.BlockSpec((c, cr), lambda i: (0, 0)),       # W1^T
                pl.BlockSpec((c, cr), lambda i: (0, 0)),       # W2
            ],
            out_specs=pl.BlockSpec((1, c, hw), lambda i: (i, 0, 0)),
            compiler_params=pltpu.CompilerParams(
                dimension_semantics=("parallel",),
                vmem_limit_bytes=vmem_limit),
        )(xf, filt_full, w1f.T, w2f)
        return y.reshape(n, c, h, w)

    # ---------------- two-pass fallback (channel-tiled, full-hw blocks) -----
    if channel_tile is None:
        tc = _choose_channel_tile(c, hw, itemsize, budget)
    else:
        tc = channel_tile
        assert c % tc == 0 and (tc % 8 == 0 or tc == c)

    # Pass 1: out_c[n, c] = sum_hw x[n, c, hw] * filt[c, hw].  Channel axis is
    # the outer grid axis so the filter block is reused across the inner N axis.
    out_c = pl.pallas_call(
        _reduce_kernel,
        out_shape=jax.ShapeDtypeStruct((n, c, 1), jnp.float32),
        grid=(c // tc, n),
        in_specs=[
            pl.BlockSpec((1, tc, hw), lambda cb, b: (b, cb, 0)),
            pl.BlockSpec((tc, hw), lambda cb, b: (cb, 0)),
        ],
        out_specs=pl.BlockSpec((1, tc, 1), lambda cb, b: (b, cb, 0)),
        compiler_params=pltpu.CompilerParams(
            dimension_semantics=("parallel", "parallel"),
            vmem_limit_bytes=vmem_limit),
    )(xf, filt_full)

    # Tiny gate MLP in plain JAX (hoisted out so the per-channel-block
    # reductions above stay independent / channel-parallel).
    hi = lax.Precision.HIGHEST
    oc = out_c[:, :, 0]                                             # (N, C)
    h1 = jnp.maximum(jnp.matmul(oc, w1f.T, precision=hi), 0.0)      # (N, Cr)
    s = jax.nn.sigmoid(jnp.matmul(h1, w2f.T, precision=hi))         # (N, C)
    s = s.reshape(n, c, 1)

    # Pass 2: y = x * s, lane-dense full-hw output blocks, both axes parallel.
    y = pl.pallas_call(
        _rescale_kernel,
        out_shape=jax.ShapeDtypeStruct((n, c, hw), x.dtype),
        grid=(n, c // tc),
        in_specs=[
            pl.BlockSpec((1, tc, hw), lambda i, cb: (i, cb, 0)),
            pl.BlockSpec((1, tc, 1), lambda i, cb: (i, cb, 0)),
        ],
        out_specs=pl.BlockSpec((1, tc, hw), lambda i, cb: (i, cb, 0)),
        compiler_params=pltpu.CompilerParams(
            dimension_semantics=("parallel", "parallel"),
            vmem_limit_bytes=vmem_limit),
    )(xf, s)

    return y.reshape(n, c, h, w)


# ----------------------------------------------------------------------------
# Pure-JAX reference (faithful to the PyTorch forward, divisible pooling)
# ----------------------------------------------------------------------------
def fdm_reference(x, dct_weight_full, w1, w2, dct_h, dct_w):
    n, c, h, w = x.shape
    x_pooled = x
    if h != dct_h or w != dct_w:
        x_pooled = x.reshape(n, c, dct_h, h // dct_h, dct_w, w // dct_w).mean(axis=(3, 5))
    out_c = jnp.sum(x_pooled * dct_weight_full[None], axis=(2, 3))
    hi = lax.Precision.HIGHEST
    h1 = jnp.maximum(jnp.matmul(out_c, w1.T, precision=hi), 0.0)
    out_s = jax.nn.sigmoid(jnp.matmul(h1, w2.T, precision=hi))
    return x * out_s[:, :, None, None]


# ----------------------------------------------------------------------------
# Test harness
# ----------------------------------------------------------------------------
def _run_case(key, N, C, H, W, dct_h, dct_w, reduction, num_basis, **kwargs):
    space_size = 8
    mapper_x, mapper_y = get_dct_basis(num_basis)
    mapper_x = [mx * (dct_h // space_size) for mx in mapper_x]
    mapper_y = [my * (dct_w // space_size) for my in mapper_y]
    basis = get_dct_basis_filter(dct_h, dct_w, mapper_x, mapper_y)     # (nb, dh, dw)
    full = get_dct_filter(dct_h, dct_w, mapper_x, mapper_y, C)         # (C, dh, dw)

    kx, k1, k2 = jax.random.split(key, 3)
    x = jax.random.normal(kx, (N, C, H, W), jnp.float32)
    cr = C // reduction
    b1 = 1.0 / math.sqrt(C)
    b2 = 1.0 / math.sqrt(cr)
    # PyTorch Linear weight layouts (out_features, in_features), bias=False.
    w1 = jax.random.uniform(k1, (cr, C), jnp.float32, -b1, b1)   # Linear(C -> C//r)
    w2 = jax.random.uniform(k2, (C, cr), jnp.float32, -b2, b2)   # Linear(C//r -> C)

    y = fdm_forward(x, jnp.asarray(basis), w1, w2, dct_h, dct_w, **kwargs)
    jax.block_until_ready(y)

    y_ref = fdm_reference(x, jnp.asarray(full), w1, w2, dct_h, dct_w)
    np.testing.assert_allclose(np.asarray(y), np.asarray(y_ref),
                               rtol=1e-4, atol=1e-4)


if __name__ == "__main__":
    key = jax.random.PRNGKey(0)
    ka, kb, kc, kd, ke = jax.random.split(key, 5)
    # Fused single-pass path, no pooling.
    _run_case(ka, N=2, C=32, H=16, W=16, dct_h=16, dct_w=16, reduction=4, num_basis=8)
    # Fused single-pass path with fused 2x2 adaptive average pooling.
    _run_case(kb, N=2, C=32, H=16, W=16, dct_h=8, dct_w=8, reduction=4, num_basis=8)
    # Forced two-pass path with channel tiling (exercises the fallback).
    _run_case(kc, N=2, C=32, H=16, W=16, dct_h=16, dct_w=16, reduction=4, num_basis=8,
              single_pass=False, channel_tile=8)
    # N == 1 -> auto-selected two-pass (channel-parallel) path.
    _run_case(kd, N=1, C=32, H=16, W=16, dct_h=16, dct_w=16, reduction=4, num_basis=8)
    # HW not a multiple of 128 (full-extent lane blocks, no padding).
    _run_case(ke, N=2, C=16, H=12, W=12, dct_h=12, dct_w=12, reduction=4, num_basis=8)
    print("KERNEL_OK")
</pallas_src>

<mosaic_0001>
module attributes {stable_mosaic.version = 11 : i64} {
  func.func @_fused_kernel(%arg0: i32, %arg1: memref<1x32x256xf32, #tpu.memory_space<vmem>>, %arg2: memref<32x256xf32, #tpu.memory_space<vmem>>, %arg3: memref<32x8xf32, #tpu.memory_space<vmem>>, %arg4: memref<32x8xf32, #tpu.memory_space<vmem>>, %arg5: memref<1x32x256xf32, #tpu.memory_space<vmem>>) attributes {dimension_semantics = [#tpu.dimension_semantics<parallel>], iteration_bounds = array<i64: 2>, scalar_prefetch = 0 : i64, scratch_operands = 0 : i64, tpu.core_type = #tpu.core_type<tc>, window_params = [{transform_indices = @transform_0, window_bounds = array<i64: 1, 32, 256>}, {pipeline_mode = #tpu.pipeline_mode<synchronous>, transform_indices = @transform_1, window_bounds = array<i64: 32, 256>}, {pipeline_mode = #tpu.pipeline_mode<synchronous>, transform_indices = @transform_2, window_bounds = array<i64: 32, 8>}, {pipeline_mode = #tpu.pipeline_mode<synchronous>, transform_indices = @transform_3, window_bounds = array<i64: 32, 8>}, {transform_indices = @transform_4, window_bounds = array<i64: 1, 32, 256>}]} {
    %c0 = arith.constant 0 : index
    %c0_0 = arith.constant 0 : index
    %c0_1 = arith.constant 0 : index
    %0 = vector.load %arg1[%c0, %c0_0, %c0_1] : memref<1x32x256xf32, #tpu.memory_space<vmem>>, vector<1x32x256xf32>
    %1 = vector.shape_cast %0 : vector<1x32x256xf32> to vector<32x256xf32>
    %c0_2 = arith.constant 0 : index
    %c0_3 = arith.constant 0 : index
    %2 = vector.load %arg2[%c0_2, %c0_3] : memref<32x256xf32, #tpu.memory_space<vmem>>, vector<32x256xf32>
    %3 = arith.mulf %1, %2 : vector<32x256xf32>
    %cst = arith.constant dense<0.000000e+00> : vector<32xf32>
    %4 = vector.multi_reduction <add>, %3, %cst [1] : vector<32x256xf32> to vector<32xf32>
    %5 = vector.shape_cast %4 : vector<32xf32> to vector<32x1xf32>
    %c0_4 = arith.constant 0 : index
    %c0_5 = arith.constant 0 : index
    %6 = vector.load %arg3[%c0_4, %c0_5] : memref<32x8xf32, #tpu.memory_space<vmem>>, vector<32x8xf32>
    %7 = vector.broadcast %5 : vector<32x1xf32> to vector<32x8xf32>
    %8 = arith.mulf %6, %7 : vector<32x8xf32>
    %cst_6 = arith.constant dense<0.000000e+00> : vector<8xf32>
    %9 = vector.multi_reduction <add>, %8, %cst_6 [0] : vector<32x8xf32> to vector<8xf32>
    %10 = vector.shape_cast %9 : vector<8xf32> to vector<1x8xf32>
    %cst_7 = arith.constant 0.000000e+00 : f32
    %11 = vector.broadcast %cst_7 : f32 to vector<1x8xf32>
    %12 = arith.maximumf %10, %11 : vector<1x8xf32>
    %c0_8 = arith.constant 0 : index
    %c0_9 = arith.constant 0 : index
    %13 = vector.load %arg4[%c0_8, %c0_9] : memref<32x8xf32, #tpu.memory_space<vmem>>, vector<32x8xf32>
    %14 = vector.broadcast %12 : vector<1x8xf32> to vector<32x8xf32>
    %15 = arith.mulf %13, %14 : vector<32x8xf32>
    %cst_10 = arith.constant dense<0.000000e+00> : vector<32xf32>
    %16 = vector.multi_reduction <add>, %15, %cst_10 [1] : vector<32x8xf32> to vector<32xf32>
    %17 = vector.shape_cast %16 : vector<32xf32> to vector<32x1xf32>
    %18 = arith.negf %17 : vector<32x1xf32>
    %19 = math.exp %18 : vector<32x1xf32>
    %cst_11 = arith.constant 1.000000e+00 : f32
    %20 = vector.broadcast %cst_11 : f32 to vector<32x1xf32>
    %21 = arith.addf %20, %19 : vector<32x1xf32>
    %22 = arith.divf %20, %21 : vector<32x1xf32>
    %23 = vector.broadcast %22 : vector<32x1xf32> to vector<32x256xf32>
    %24 = arith.mulf %1, %23 : vector<32x256xf32>
    %25 = vector.shape_cast %24 : vector<32x256xf32> to vector<1x32x256xf32>
    %c0_12 = arith.constant 0 : index
    %c0_13 = arith.constant 0 : index
    %c0_14 = arith.constant 0 : index
    %26 = vector.load %arg5[%c0_12, %c0_13, %c0_14] : memref<1x32x256xf32, #tpu.memory_space<vmem>>, vector<1x32x256xf32>
    tpu.vector_store %arg5[%c0_12, %c0_13, %c0_14], %25 {strides = array<i32>} : memref<1x32x256xf32, #tpu.memory_space<vmem>>, vector<1x32x256xf32>,
    return
  }
  func.func @transform_0(%arg0: i32) -> (i32, i32, i32) {
    %c0_i32 = arith.constant 0 : i32
    %c0_i32_0 = arith.constant 0 : i32
    %c0_i32_1 = arith.constant 0 : i32
    return %arg0, %c0_i32, %c0_i32_0 : i32, i32, i32
  }
  func.func @transform_1(%arg0: i32) -> (i32, i32) {
    %c0_i32 = arith.constant 0 : i32
    %c0_i32_0 = arith.constant 0 : i32
    %c0_i32_1 = arith.constant 0 : i32
    return %c0_i32, %c0_i32_0 : i32, i32
  }
  func.func @transform_2(%arg0: i32) -> (i32, i32) {
    %c0_i32 = arith.constant 0 : i32
    %c0_i32_0 = arith.constant 0 : i32
    %c0_i32_1 = arith.constant 0 : i32
    return %c0_i32, %c0_i32_0 : i32, i32
  }
  func.func @transform_3(%arg0: i32) -> (i32, i32) {
    %c0_i32 = arith.constant 0 : i32
    %c0_i32_0 = arith.constant 0 : i32
    %c0_i32_1 = arith.constant 0 : i32
    return %c0_i32, %c0_i32_0 : i32, i32
  }
  func.func @transform_4(%arg0: i32) -> (i32, i32, i32) {
    %c0_i32 = arith.constant 0 : i32
    %c0_i32_0 = arith.constant 0 : i32
    %c0_i32_1 = arith.constant 0 : i32
    return %arg0, %c0_i32, %c0_i32_0 : i32, i32, i32
  }
}

</mosaic_0001>

<llo_original>
// kernel: tpu_custom_call.1
$region0: #{tpu_custom_call.1}
  #allocation0 [shape = 'u32[]', space=smem, size = 0x4, offset = 0x4, fixed_abs, tag = 'smem constant byte address 0x4 - core index']
  #allocation1 [shape = 'u32[72,128]{1,0:T(1,128)}', space=vmem, size = 0x9000, scoped, tag = 'internal scratch']
  %s0 = inlined_call_operand.hbm [shape: f32[2,32,256], index: 0, kind: input, shape index: {}]
  %s1 = inlined_call_operand.vmem [shape: f32[32,256], index: 1, kind: input, shape index: {}]
  %s2 = inlined_call_operand.vmem [shape: f32[32,8], index: 2, kind: input, shape index: {}]
  %s3 = inlined_call_operand.vmem [shape: f32[32,8], index: 3, kind: input, shape index: {}]
  %s4 = inlined_call_operand.hbm [shape: f32[2,32,256], index: 4, kind: output, shape index: {}]
  %s5 = sld [smem:[#allocation0]]
  $region53: #{tpu_custom_call.1} parent=0
    _
  %s7 = ssub.s32 1, %s5
  %s8 = scalar_select 0, %s7, %s5
  $region1: #{tpu_custom_call.1} parent=0
    #allocation2 [shape = 'u8[65536]{0}', space=vmem, size = 0x10000, scoped, tag = 'input window, operand 0']
    #allocation3 [shape = 's32[2]{0}', space=sflag, size = 0x8, scoped, tag = 'scoped memory for tpu_custom_call.1']
    #allocation4 [shape = 's32[2]{0}', space=sflag, size = 0x8, scoped, tag = 'scoped memory for tpu_custom_call.1']
    #allocation5 [shape = 'u8[65536]{0}', space=vmem, size = 0x10000, scoped, tag = 'output window, operand 0']
    %9 = vsyncpa [#allocation3], 0
    %s10 = scalar_lea.sflag [#allocation3], 1
    %11 = vsyncpa %s10, 0
    %12 = vsyncpa [#allocation4], 0
    %s13 = scalar_lea.sflag [#allocation4], 1
    %14 = vsyncpa %s13, 0
    loop: start=0, step=1, limit=4
    $region2: #{tpu_custom_call.1} parent=1 // loop_pre_header
      _
    $region3: #{tpu_custom_call.1} parent=1 // loop_header
      %s16 = sphi 0, %s20
      %p17 = scmp.ge.s32.totalorder %s16, 4
      %s26 = sphi 0, %s28
      %s29 = sphi 0, %s26
      %s30 = sphi 0, %s29
      %s46 = sphi 0, %s30
      %s50 = sphi 0, %s50
      %s52 = sphi 0, %s50
      %s53 = sphi 0, %s52
      %s67 = sphi 0, %s53
      %s71 = sphi 0, %s71
      %s73 = sphi 0, %s71
      %s74 = sphi 0, %s73
      %s88 = sphi 0, %s74
      %s92 = sphi 0, %s92
      %s94 = sphi 0, %s92
      %s95 = sphi 0, %s94
      %s109 = sphi 0, %s95
      %s115 = sphi 0, %s117
      %s118 = sphi 0, %s115
      %s119 = sphi 0, %s118
      %s135 = sphi 0, %s119
    $region4: #{tpu_custom_call.1} parent=1 // loop_header_branch
      %19 = sbr.rel (%p17) target = $region8
    $region5: #{tpu_custom_call.1} parent=1 // loop_body
      %s21 = ssub.s32 %s16, 1
      %s22 = ssub.s32 %s16, 2
      %s23 = sadd.s32 %s16, 1
      %s24 = ssub.s32 %s16, %s23
      %p25 = scmp.eq.s32.totalorder %s24, 0
      %s27 = sadd.s32 %s26, 1
      %s28 = scalar_select %p25, %s26, %s27
      %p31 = pneg %p25
      %p32 = scmp.eq.s32.totalorder %s16, 1
      %p33 = por %p31, %p32
      %p34 = scmp.ne.s32.totalorder %s26, %s29
      %p35 = scmp.eq.s32.totalorder %s16, 0
      %p36 = por %p34, %p35
      %p37 = scmp.ne.s32.totalorder %s26, %s29
      %p38 = scmp.eq.s32.totalorder %s21, 1
      %p39 = por %p37, %p38
      %p40 = scmp.ne.s32.totalorder %s29, %s30
      %p41 = scmp.eq.s32.totalorder %s21, 0
      %p42 = por %p40, %p41
      %p43 = scmp.ne.s32.totalorder %s29, %s30
      %p44 = scmp.eq.s32.totalorder %s22, 1
      %p45 = por %p43, %p44
      %p47 = scmp.ne.s32.totalorder %s30, %s46
      %p48 = scmp.eq.s32.totalorder %s22, 0
      %p49 = por %p47, %p48
      %s51 = sadd.s32 %s50, 1
      %p54 = scmp.eq.s32.totalorder %s16, 1
      %p55 = scmp.ne.s32.totalorder %s50, %s52
      %p56 = scmp.eq.s32.totalorder %s16, 0
      %p57 = por %p55, %p56
      %p58 = scmp.ne.s32.totalorder %s50, %s52
      %p59 = scmp.eq.s32.totalorder %s21, 1
      %p60 = por %p58, %p59
      %p61 = scmp.ne.s32.totalorder %s52, %s53
      %p62 = scmp.eq.s32.totalorder %s21, 0
      %p63 = por %p61, %p62
      %p64 = scmp.ne.s32.totalorder %s52, %s53
      %p65 = scmp.eq.s32.totalorder %s22, 1
      %p66 = por %p64, %p65
      %p68 = scmp.ne.s32.totalorder %s53, %s67
      %p69 = scmp.eq.s32.totalorder %s22, 0
      %p70 = por %p68, %p69
      %s72 = sadd.s32 %s71, 1
      %p75 = scmp.eq.s32.totalorder %s16, 1
      %p76 = scmp.ne.s32.totalorder %s71, %s73
      %p77 = scmp.eq.s32.totalorder %s16, 0
      %p78 = por %p76, %p77
      %p79 = scmp.ne.s32.totalorder %s71, %s73
      %p80 = scmp.eq.s32.totalorder %s21, 1
      %p81 = por %p79, %p80
      %p82 = scmp.ne.s32.totalorder %s73, %s74
      %p83 = scmp.eq.s32.totalorder %s21, 0
      %p84 = por %p82, %p83
      %p85 = scmp.ne.s32.totalorder %s73, %s74
      %p86 = scmp.eq.s32.totalorder %s22, 1
      %p87 = por %p85, %p86
      %p89 = scmp.ne.s32.totalorder %s74, %s88
      %p90 = scmp.eq.s32.totalorder %s22, 0
      %p91 = por %p89, %p90
      %s93 = sadd.s32 %s92, 1
      %p96 = scmp.eq.s32.totalorder %s16, 1
      %p97 = scmp.ne.s32.totalorder %s92, %s94
      %p98 = scmp.eq.s32.totalorder %s16, 0
      %p99 = por %p97, %p98
      %p100 = scmp.ne.s32.totalorder %s92, %s94
      %p101 = scmp.eq.s32.totalorder %s21, 1
      %p102 = por %p100, %p101
      %p103 = scmp.ne.s32.totalorder %s94, %s95
      %p104 = scmp.eq.s32.totalorder %s21, 0
      %p105 = por %p103, %p104
      %p106 = scmp.ne.s32.totalorder %s94, %s95
      %p107 = scmp.eq.s32.totalorder %s22, 1
      %p108 = por %p106, %p107
      %p110 = scmp.ne.s32.totalorder %s95, %s109
      %p111 = scmp.eq.s32.totalorder %s22, 0
      %p112 = por %p110, %p111
      %s113 = ssub.s32 %s16, %s23
      %p114 = scmp.eq.s32.totalorder %s113, 0
      %s116 = sadd.s32 %s115, 1
      %s117 = scalar_select %p114, %s115, %s116
      %p120 = pneg %p114
      %p121 = scmp.eq.s32.totalorder %s16, 1
      %p122 = por %p120, %p121
      %p123 = scmp.ne.s32.totalorder %s115, %s118
      %p124 = scmp.eq.s32.totalorder %s16, 0
      %p125 = por %p123, %p124
      %p126 = scmp.ne.s32.totalorder %s115, %s118
      %p127 = scmp.eq.s32.totalorder %s21, 1
      %p128 = por %p126, %p127
      %p129 = scmp.ne.s32.totalorder %s118, %s119
      %p130 = scmp.eq.s32.totalorder %s21, 0
      %p131 = por %p129, %p130
      %p132 = scmp.ne.s32.totalorder %s118, %s119
      %p133 = scmp.eq.s32.totalorder %s22, 1
      %p134 = por %p132, %p133
      %p136 = scmp.ne.s32.totalorder %s119, %s135
      %p137 = scmp.eq.s32.totalorder %s22, 0
      %p138 = por %p136, %p137
      %p139 = scmp.le.s32.totalorder 1, %s16
      %p140 = scmp.lt.s32.totalorder %s16, 3
      %p141 = pnand %p139, %p140
      %p142 = pneg %p141
      // Predicated region
      $region9: #{tpu_custom_call.1} parent=5 // pred_check
        _
      $region10: #{tpu_custom_call.1} parent=5 // pred_check_branch
        %144 = sbr.rel (%p141) target = $region12
      $region11: #{tpu_custom_call.1} parent=5 // pred_region
        %s145 = ssub.s32 %s16, 1
        // Predicated region
        $region13: #{tpu_custom_call.1} parent=11 // pred_check
          %p146 = pneg %p63
        $region14: #{tpu_custom_call.1} parent=11 // pred_check_branch
          %148 = sbr.rel (%p146) target = $region16
        $region15: #{tpu_custom_call.1} parent=11 // pred_region
          _
        $region16: #{tpu_custom_call.1} parent=11 // pred_fallthru
          _
        // Predicated region
        $region17: #{tpu_custom_call.1} parent=11 // pred_check
          %p149 = pneg %p84
        $region18: #{tpu_custom_call.1} parent=11 // pred_check_branch
          %151 = sbr.rel (%p149) target = $region20
        $region19: #{tpu_custom_call.1} parent=11 // pred_region
          _
        $region20: #{tpu_custom_call.1} parent=11 // pred_fallthru
          _
        // Predicated region
        $region21: #{tpu_custom_call.1} parent=11 // pred_check
          %p152 = pneg %p105
        $region22: #{tpu_custom_call.1} parent=11 // pred_check_branch
          %154 = sbr.rel (%p152) target = $region24
        $region23: #{tpu_custom_call.1} parent=11 // pred_region
          _
        $region24: #{tpu_custom_call.1} parent=11 // pred_fallthru
          _
      $region12: #{tpu_custom_call.1} parent=5 // pred_fallthru
        _
      %p155 = scmp.lt.s32.totalorder %s16, 2
      // Predicated region
      $region25: #{tpu_custom_call.1} parent=5 // pred_check
        %p156 = pneg %p155
      $region26: #{tpu_custom_call.1} parent=5 // pred_check_branch
        %158 = sbr.rel (%p156) target = $region28
      $region27: #{tpu_custom_call.1} parent=5 // pred_region
        // Predicated region
        $region29: #{tpu_custom_call.1} parent=27 // pred_check
          %p159 = pneg %p36
        $region30: #{tpu_custom_call.1} parent=27 // pred_check_branch
          %161 = sbr.rel (%p159) target = $region32
        $region31: #{tpu_custom_call.1} parent=27 // pred_region
          %s162 = sand.u32 %s26, 1
          %s163 = scalar_lea.sflag [#allocation3], %s162
          %s164 = sand.u32 %s26, 1
          %s165 = smul.addr %s164, 64
          %s166 = scalar_lea.vmem [#allocation2], %s165
          %168 = vsyncadd %s163, 0
          %s169 = smul.addr %s16, 8
          %s170 = smul.addr %s169, 8
          %s171 = scalar_lea.hbm %s0, %s170
          %s172 = sshll.u32 %s171, 4
          %s173 = int_to_ptr.hbm [resolvable:$true] %s172
          %s174 = sshll.u32 %s166, 4
          %s175 = int_to_ptr.vmem [resolvable:$true] %s174
          %180 = dma.hbm_to_vmem [thread:$0]  %s173, 1024, %s175, %s163, 256, 256, 16
        $region32: #{tpu_custom_call.1} parent=27 // pred_fallthru
          _
      $region28: #{tpu_custom_call.1} parent=5 // pred_fallthru
        _
      %p181 = scmp.le.s32.totalorder 1, %s16
      %p182 = scmp.lt.s32.totalorder %s16, 3
      %p183 = pnand %p181, %p182
      %p184 = pneg %p183
      // Predicated region
      $region33: #{tpu_custom_call.1} parent=5 // pred_check
        _
      $region34: #{tpu_custom_call.1} parent=5 // pred_check_branch
        %186 = sbr.rel (%p183) target = $region36
      $region35: #{tpu_custom_call.1} parent=5 // pred_region
        %s187 = ssub.s32 %s16, 1
        %s188 = sand.u32 %s29, 1
        %s189 = scalar_lea.sflag [#allocation3], %s188
        %s190 = sand.u32 %s29, 1
        %s191 = smul.addr %s190, 64
        %s192 = scalar_lea.vmem [#allocation2], %s191
        // Predicated region
        $region37: #{tpu_custom_call.1} parent=35 // pred_check
          %p193 = pneg %p42
        $region38: #{tpu_custom_call.1} parent=35 // pred_check_branch
          %195 = sbr.rel (%p193) target = $region40
        $region39: #{tpu_custom_call.1} parent=35 // pred_region
          %197 = dma.done %s189, 1024
        $region40: #{tpu_custom_call.1} parent=35 // pred_fallthru
          _
        %s198 = sand.u32 %s29, 1
        %s199 = scalar_lea.sflag [#allocation3], %s198
        %s200 = sand.u32 %s29, 1
        %s201 = smul.addr %s200, 64
        %s202 = scalar_lea.vmem [#allocation2], %s201
        %p203 = pneg %p42
        %p204 = pneg %p39
        %p205 = pneg %p63
        %p206 = pneg %p60
        %p207 = pneg %p84
        %p208 = pneg %p81
        %p209 = pneg %p105
        %p210 = pneg %p102
        %p211 = pneg %p131
        %p212 = pneg %p128
        %s213 = sand.u32 %s118, 1
        %s214 = scalar_lea.sflag [#allocation4], %s213
        %s215 = sand.u32 %s118, 1
        %s216 = smul.addr %s215, 64
        %s217 = scalar_lea.vmem [#allocation5], %s216
        %v218 = vld [vmem:[%s192] sm:$0xff]
        %v219 = vld [vmem:[%s192 + $0x8] sm:$0xff]
        %v220 = vld [vmem:[%s192 + $0x10] sm:$0xff]
        %v221 = vld [vmem:[%s192 + $0x18] sm:$0xff]
        %v222 = vld [vmem:[%s192 + $0x20] sm:$0xff]
        %v223 = vld [vmem:[%s192 + $0x28] sm:$0xff]
        %v224 = vld [vmem:[%s192 + $0x30] sm:$0xff]
        %v225 = vld [vmem:[%s192 + $0x38] sm:$0xff]
        %v226 = vld [vmem:[%s1] sm:$0xff]
        %v227 = vld [vmem:[%s1 + $0x8] sm:$0xff]
        %v228 = vld [vmem:[%s1 + $0x10] sm:$0xff]
        %v229 = vld [vmem:[%s1 + $0x18] sm:$0xff]
        %v230 = vld [vmem:[%s1 + $0x20] sm:$0xff]
        %v231 = vld [vmem:[%s1 + $0x28] sm:$0xff]
        %v232 = vld [vmem:[%s1 + $0x30] sm:$0xff]
        %v233 = vld [vmem:[%s1 + $0x38] sm:$0xff]
        %v234 = vmul.f32 %v218, %v226
        %v235 = vmul.f32 %v219, %v227
        %v236 = vmul.f32 %v220, %v228
        %v237 = vmul.f32 %v221, %v229
        %v238 = vmul.f32 %v222, %v230
        %v239 = vmul.f32 %v223, %v231
        %v240 = vmul.f32 %v224, %v232
        %v241 = vmul.f32 %v225, %v233
        %v242 = vadd.f32 %v234, %v235
        %243 = vadd.xlane.f32.xlu0 %v242
        %v244 = vpop.xlane.xlu0 %243
        %v245 = vadd.f32 %v236, %v237
        %246 = vadd.xlane.f32.xlu0 %v245
        %v247 = vpop.xlane.xlu0 %246
        %v248 = vadd.f32 %v238, %v239
        %249 = vadd.xlane.f32.xlu0 %v248
        %v250 = vpop.xlane.xlu0 %249
        %v251 = vadd.f32 %v240, %v241
        %252 = vadd.xlane.f32.xlu0 %v251
        %v253 = vpop.xlane.xlu0 %252
        %v254 = vld [vmem:[%s2] sm:$0xff]
        %v255 = vld [vmem:[%s2 + $0x8] sm:$0xff]
        %v256 = vld [vmem:[%s2 + $0x10] sm:$0xff]
        %v257 = vld [vmem:[%s2 + $0x18] sm:$0xff]
        %v258 = vmul.f32 %v254, %v244
        %v259 = vmul.f32 %v255, %v247
        %v260 = vmul.f32 %v256, %v250
        %v261 = vmul.f32 %v257, %v253
        %vm262 = vcmask 64512
        %v263 = vsel %vm262, %v258, 0.0
        %v264 = vsel %vm262, %v259, 0.0
        %v265 = vadd.f32 %v263, %v264
        %v266 = vsel %vm262, %v260, 0.0
        %v267 = vadd.f32 %v265, %v266
        %v268 = vsel %vm262, %v261, 0.0
        %v269 = vadd.f32 %v267, %v268
        %v270 = vrot.slane %v269, 4
        %v271 = vadd.f32 %v269, %v270
        %v272 = vrot.slane %v271, 2
        %v273 = vadd.f32 %v271, %v272
        %v274 = vrot.slane %v273, 1
        %v275 = vadd.f32 %v273, %v274
        %v276 = vmax.f32 %v275, 0.0
        %v277 = vld [vmem:[%s3] sm:$0xff]
        %v278 = vld [vmem:[%s3 + $0x8] sm:$0xff]
        %v279 = vld [vmem:[%s3 + $0x10] sm:$0xff]
        %v280 = vld [vmem:[%s3 + $0x18] sm:$0xff]
        %v281 = vmul.f32 %v277, %v276
        %v282 = vmul.f32 %v278, %v276
        %v283 = vmul.f32 %v279, %v276
        %v284 = vmul.f32 %v280, %v276
        %v285 = vsel %vm262, %v281, 0.0
        %286 = vadd.xlane.f32.xlu0 %v285
        %v287 = vpop.xlane.xlu0 %286
        %v288 = vsel %vm262, %v282, 0.0
        %289 = vadd.xlane.f32.xlu0 %v288
        %v290 = vpop.xlane.xlu0 %289
        %v291 = vsel %vm262, %v283, 0.0
        %292 = vadd.xlane.f32.xlu0 %v291
        %v293 = vpop.xlane.xlu0 %292
        %v294 = vsel %vm262, %v284, 0.0
        %295 = vadd.xlane.f32.xlu0 %v294
        %v296 = vpop.xlane.xlu0 %295
        %v297 = vxor.u32 %v287, 2147483648
        %v298 = vxor.u32 %v290, 2147483648
        %v299 = vxor.u32 %v293, 2147483648
        %v300 = vxor.u32 %v296, 2147483648
        %v301 = vmul.f32 %v297, 1.442695
        %v302 = vpow.pop %v301
        %v303 = vmul.f32 %v298, 1.442695
        %v304 = vpow.pop %v303
        %v305 = vmul.f32 %v299, 1.442695
        %v306 = vpow.pop %v305
        %v307 = vmul.f32 %v300, 1.442695
        %v308 = vpow.pop %v307
        %v309 = vadd.f32 %v302, 1.0
        %v310 = vadd.f32 %v304, 1.0
        %v311 = vadd.f32 %v306, 1.0
        %v312 = vadd.f32 %v308, 1.0
        %v313 = vrcp.pop %v309
        %v314 = vmul.f32 %v309, %v313
        %v315 = vsub.f32 1.0, %v314
        %v316 = vmul.f32 %v313, %v315
        %v317 = vadd.f32 %v313, %v316
        %vm318 = vweird.f32 %v309
        %vm319 = vweird.f32 %v313
        %vm320 = vmor %vm318, %vm319
        %v321 = vsel %vm320, %v313, %v317
        %v322 = vand.u32 2147483647, %v309
        %vm323 = vcmp.eq.f32.partialorder %v322, 8.507059e+37
        %v324 = vand.u32 %v309, 2147483648
        %v325 = vor.u32 1.1754944e-38, %v324
        %v326 = vsel %vm323, %v325, %v321
        %v327 = vmul.f32 1.0, %v326
        %v328 = vrcp.pop %v310
        %v329 = vmul.f32 %v310, %v328
        %v330 = vsub.f32 1.0, %v329
        %v331 = vmul.f32 %v328, %v330
        %v332 = vadd.f32 %v328, %v331
        %vm333 = vweird.f32 %v310
        %vm334 = vweird.f32 %v328
        %vm335 = vmor %vm333, %vm334
        %v336 = vsel %vm335, %v328, %v332
        %v337 = vand.u32 2147483647, %v310
        %vm338 = vcmp.eq.f32.partialorder %v337, 8.507059e+37
        %v339 = vand.u32 %v310, 2147483648
        %v340 = vor.u32 1.1754944e-38, %v339
        %v341 = vsel %vm338, %v340, %v336
        %v342 = vmul.f32 1.0, %v341
        %v343 = vrcp.pop %v311
        %v344 = vmul.f32 %v311, %v343
        %v345 = vsub.f32 1.0, %v344
        %v346 = vmul.f32 %v343, %v345
        %v347 = vadd.f32 %v343, %v346
        %vm348 = vweird.f32 %v311
        %vm349 = vweird.f32 %v343
        %vm350 = vmor %vm348, %vm349
        %v351 = vsel %vm350, %v343, %v347
        %v352 = vand.u32 2147483647, %v311
        %vm353 = vcmp.eq.f32.partialorder %v352, 8.507059e+37
        %v354 = vand.u32 %v311, 2147483648
        %v355 = vor.u32 1.1754944e-38, %v354
        %v356 = vsel %vm353, %v355, %v351
        %v357 = vmul.f32 1.0, %v356
        %v358 = vrcp.pop %v312
        %v359 = vmul.f32 %v312, %v358
        %v360 = vsub.f32 1.0, %v359
        %v361 = vmul.f32 %v358, %v360
        %v362 = vadd.f32 %v358, %v361
        %vm363 = vweird.f32 %v312
        %vm364 = vweird.f32 %v358
        %vm365 = vmor %vm363, %vm364
        %v366 = vsel %vm365, %v358, %v362
        %v367 = vand.u32 2147483647, %v312
        %vm368 = vcmp.eq.f32.partialorder %v367, 8.507059e+37
        %v369 = vand.u32 %v312, 2147483648
        %v370 = vor.u32 1.1754944e-38, %v369
        %v371 = vsel %vm368, %v370, %v366
        %v372 = vmul.f32 1.0, %v371
        %v373 = vmul.f32 %v218, %v327
        %v374 = vmul.f32 %v219, %v327
        %v375 = vmul.f32 %v220, %v342
        %v376 = vmul.f32 %v221, %v342
        %v377 = vmul.f32 %v222, %v357
        %v378 = vmul.f32 %v223, %v357
        %v379 = vmul.f32 %v224, %v372
        %v380 = vmul.f32 %v225, %v372
        %381 = vst [vmem:[%s217] sm:$0xff] %v373
        %382 = vst [vmem:[%s217 + $0x8] sm:$0xff] %v374
        %383 = vst [vmem:[%s217 + $0x10] sm:$0xff] %v375
        %384 = vst [vmem:[%s217 + $0x18] sm:$0xff] %v376
        %385 = vst [vmem:[%s217 + $0x20] sm:$0xff] %v377
        %386 = vst [vmem:[%s217 + $0x28] sm:$0xff] %v378
        %387 = vst [vmem:[%s217 + $0x30] sm:$0xff] %v379
        %388 = vst [vmem:[%s217 + $0x38] sm:$0xff] %v380
        %s389 = sand.u32 %s118, 1
        %s390 = scalar_lea.sflag [#allocation4], %s389
        %s391 = sand.u32 %s118, 1
        %s392 = smul.addr %s391, 64
        %s393 = scalar_lea.vmem [#allocation5], %s392
        // Predicated region
        $region41: #{tpu_custom_call.1} parent=35 // pred_check
          %p394 = pneg %p128
        $region42: #{tpu_custom_call.1} parent=35 // pred_check_branch
          %396 = sbr.rel (%p394) target = $region44
        $region43: #{tpu_custom_call.1} parent=35 // pred_region
          %398 = vsyncadd %s390, 0
          %s399 = smul.addr %s21, 8
          %s400 = smul.addr %s399, 8
          %s401 = scalar_lea.hbm %s4, %s400
          %s402 = sshll.u32 %s393, 4
          %s403 = int_to_ptr.vmem [resolvable:$true] %s402
          %s404 = sshll.u32 %s401, 4
          %s405 = int_to_ptr.hbm [resolvable:$true] %s404
          %410 = dma.vmem_to_hbm [thread:$0]  %s403, 1024, %s405, %s390, 256, 256, 16
        $region44: #{tpu_custom_call.1} parent=35 // pred_fallthru
          _
      $region36: #{tpu_custom_call.1} parent=5 // pred_fallthru
        _
      %p411 = scmp.le.s32.totalorder 2, %s16
      // Predicated region
      $region45: #{tpu_custom_call.1} parent=5 // pred_check
        %p412 = pneg %p411
      $region46: #{tpu_custom_call.1} parent=5 // pred_check_branch
        %414 = sbr.rel (%p412) target = $region48
      $region47: #{tpu_custom_call.1} parent=5 // pred_region
        %s415 = ssub.s32 %s16, 2
        // Predicated region
        $region49: #{tpu_custom_call.1} parent=47 // pred_check
          %p416 = pneg %p134
        $region50: #{tpu_custom_call.1} parent=47 // pred_check_branch
          %418 = sbr.rel (%p416) target = $region52
        $region51: #{tpu_custom_call.1} parent=47 // pred_region
          %s419 = sand.u32 %s119, 1
          %s420 = scalar_lea.sflag [#allocation4], %s419
          %s421 = sand.u32 %s119, 1
          %s422 = smul.addr %s421, 64
          %s423 = scalar_lea.vmem [#allocation5], %s422
          %425 = dma.done %s420, 1024
        $region52: #{tpu_custom_call.1} parent=47 // pred_fallthru
          _
      $region48: #{tpu_custom_call.1} parent=5 // pred_fallthru
        _
    $region6: #{tpu_custom_call.1} parent=1 // loop_footer
      %s20 = sadd.s32 1, %s16
    $region7: #{tpu_custom_call.1} parent=1 // loop_footer_branch
      %15 = sbr.rel target = $region3
    $region8: #{tpu_custom_call.1} parent=1 // loop_exit
      _
    %426 = vsyncpa [#allocation3], 1
    %s427 = scalar_lea.sflag [#allocation3], 1
    %428 = vsyncpa %s427, 1
    %429 = vsyncpa [#allocation4], 1
    %s430 = scalar_lea.sflag [#allocation4], 1
    %431 = vsyncpa %s430, 1

</llo_original>
